<compile_context>
chip_gen: v5e
topology: v5e:2x2
jax: 0.10.0
libtpu: 0.0.40
codegen_flags: <defaults>
</compile_context>

<pallas_src>
import functools

import jax
import jax.numpy as jnp
from jax.experimental import pallas as pl
from jax.experimental.pallas import tpu as pltpu

_LANE = 128      # vreg lane width
_SUBLANE = 8     # vreg sublane count (fp32)


def _round_up(v, m):
    return (v + m - 1) // m * m


def _encoder_kernel(x_ref, w1_ref, b1_ref, w2_ref, b2_ref, out_ref):
    # x:  (TM, F)   activations tile (compute dtype, bf16 by default)
    # w1: (F, Hp)   fc1 weight, K-major (pre-transposed, out-padded)
    # b1: (1, Hp)   fc1 bias (fp32)
    # w2: (Hp, Lp)  fc2 weight, K-major (pre-transposed, out-padded)
    # b2: (1, Lp)   fc2 bias (fp32)
    # out:(TM, Lp)  lane-dense fp32 output tile
    x = x_ref[...]

    # Canonical (M,K)x(K,N) MXU contraction, fp32 accumulation.
    h = jnp.dot(x, w1_ref[...], preferred_element_type=jnp.float32)
    h = jnp.maximum(h + b1_ref[...], 0.0)           # bias + ReLU in fp32 (VPU)

    y = jnp.dot(h.astype(w2_ref.dtype), w2_ref[...],
                preferred_element_type=jnp.float32)
    out_ref[...] = (y + b2_ref[...]).astype(out_ref.dtype)


def prepare_params(w1, b1, w2, b2, compute_dtype=jnp.bfloat16):
    """One-time packing of PyTorch-layout (out, in) parameters.

    Pre-transposes weights to K-major layout (so the kernel runs canonical
    MXU contractions with no hot-path transposes), zero-pads the 'out' dims up
    to the 128-lane width (lane-dense intermediates/stores), and casts weights
    to the MXU-native compute dtype (bf16 by default).
    """
    h, f = w1.shape      # fc1: (hidden, in)
    l, _ = w2.shape      # fc2: (latent, hidden)
    hp = _round_up(h, _LANE)
    lp = _round_up(l, _LANE)

    w1p = jnp.zeros((f, hp), compute_dtype).at[:, :h].set(w1.T.astype(compute_dtype))
    b1p = jnp.zeros((1, hp), jnp.float32).at[0, :h].set(b1.astype(jnp.float32))
    w2p = jnp.zeros((hp, lp), compute_dtype).at[:h, :l].set(w2.T.astype(compute_dtype))
    b2p = jnp.zeros((1, lp), jnp.float32).at[0, :l].set(b2.astype(jnp.float32))
    return (w1p, b1p, w2p, b2p)


def _pick_row_tile(n, f, hp, lp, wbytes):
    """Row tile size with a generation-aware VMEM budget and >=2 steps for v7x."""
    def tile_bytes(t):
        # x (double-buffered) + fp32 out (double-buffered)
        # + fp32 intermediate h + its compute-dtype copy fed to the 2nd matmul.
        return 2 * t * f * wbytes + 2 * t * lp * 4 + t * hp * (4 + wbytes)

    tm = min(512, _round_up(n, _SUBLANE))
    if n > _SUBLANE:
        # Guarantee >= 2 grid steps so ("parallel",) can shard across both
        # TensorCores on v7x; harmless on single-TC v5e/v6e.
        tm = min(tm, _round_up(pl.cdiv(n, 2), _SUBLANE))
    # Stay well inside the smallest default scoped VMEM limit (16 MiB on v5e,
    # 32 MiB default on v6e/v7x, 64 MiB physical on v7x).
    while tm > _SUBLANE and tile_bytes(tm) > (10 << 20):
        tm = max(_SUBLANE, _round_up(tm // 2, _SUBLANE))
    return tm, tile_bytes(tm)


@functools.partial(jax.jit, static_argnames=("latent_dim",))
def encoder_forward(x, params, latent_dim):
    """x: (N, in_features); params from prepare_params(). Returns (N, latent_dim) fp32."""
    w1p, b1p, w2p, b2p = params
    n, f = x.shape
    hp = w1p.shape[1]
    lp = w2p.shape[1]

    x = x.astype(w1p.dtype)                 # single cast; halves x DMA bytes in bf16 mode
    wbytes = jnp.dtype(w1p.dtype).itemsize

    tm, tile_b = _pick_row_tile(n, f, hp, lp, wbytes)
    grid = (pl.cdiv(n, tm),)                # ragged last block handled by Pallas masking

    weight_bytes = (f * hp + hp * lp) * wbytes + (hp + lp) * 4
    vmem_limit = int(min(max(2 * (tile_b + 2 * weight_bytes) + (2 << 20), 16 << 20),
                         48 << 20))

    cost = pl.CostEstimate(
        flops=2 * n * (f * hp + hp * lp),
        transcendentals=0,
        bytes_accessed=(n * f * wbytes
                        + weight_bytes
                        + n * lp * 4),
    )

    out = pl.pallas_call(
        _encoder_kernel,
        out_shape=jax.ShapeDtypeStruct((n, lp), jnp.float32),
        grid=grid,
        in_specs=[
            pl.BlockSpec((tm, f), lambda i: (i, 0)),    # activations tiled over rows
            pl.BlockSpec((f, hp), lambda i: (0, 0)),    # weights/biases: constant
            pl.BlockSpec((1, hp), lambda i: (0, 0)),    # index_map -> VMEM-resident
            pl.BlockSpec((hp, lp), lambda i: (0, 0)),
            pl.BlockSpec((1, lp), lambda i: (0, 0)),
        ],
        out_specs=pl.BlockSpec((tm, lp), lambda i: (i, 0)),
        compiler_params=pltpu.CompilerParams(
            dimension_semantics=("parallel",),          # shard rows across TCs (v7x)
            vmem_limit_bytes=vmem_limit,
        ),
        cost_estimate=cost,
    )(x, w1p, b1p, w2p, b2p)

    return out[:, :latent_dim]


def reference_forward(x, w1, b1, w2, b2):
    h = jnp.maximum(x @ w1.T + b1, 0.0)
    return h @ w2.T + b2


if __name__ == "__main__":
    # Deterministic synthetic parameters/input (no checkpoint).
    in_features = 64
    hidden_dim = 32
    latent_dim = 16
    batch = 8

    key = jax.random.PRNGKey(0)
    kx, k1, k2, k3, k4 = jax.random.split(key, 5)

    x = jax.random.normal(kx, (batch, in_features), dtype=jnp.float32)
    # nn.Linear default init ~ U(-1/sqrt(fan_in), 1/sqrt(fan_in)); exact dist is
    # irrelevant for the kernel, just deterministic.
    bound1 = 1.0 / in_features ** 0.5
    bound2 = 1.0 / hidden_dim ** 0.5
    w1 = jax.random.uniform(k1, (hidden_dim, in_features), jnp.float32, -bound1, bound1)
    b1 = jax.random.uniform(k2, (hidden_dim,), jnp.float32, -bound1, bound1)
    w2 = jax.random.uniform(k3, (latent_dim, hidden_dim), jnp.float32, -bound2, bound2)
    b2 = jax.random.uniform(k4, (latent_dim,), jnp.float32, -bound2, bound2)

    ref = reference_forward(x, w1, b1, w2, b2)

    # Default (bf16 MXU) path -- loose tolerance vs the fp32 reference.
    params_bf16 = prepare_params(w1, b1, w2, b2)            # compute_dtype=bf16
    out = jax.block_until_ready(encoder_forward(x, params_bf16, latent_dim=latent_dim))
    assert out.shape == (batch, latent_dim)
    assert jnp.allclose(out, ref, atol=5e-2, rtol=5e-2), "bf16 path mismatch vs reference"

    # fp32 path -- tight tolerance (validates kernel structure exactly).
    params_f32 = prepare_params(w1, b1, w2, b2, compute_dtype=jnp.float32)
    out32 = jax.block_until_ready(encoder_forward(x, params_f32, latent_dim=latent_dim))
    assert jnp.allclose(out32, ref, atol=1e-5, rtol=1e-5), "fp32 path mismatch vs reference"

    print("KERNEL_OK")
</pallas_src>

<mosaic_0001>
module attributes {stable_mosaic.version = 11 : i64} {
  func.func @_encoder_kernel(%arg0: i32, %arg1: memref<8x64xbf16, #tpu.memory_space<vmem>>, %arg2: memref<64x128xbf16, #tpu.memory_space<vmem>>, %arg3: memref<1x128xf32, #tpu.memory_space<vmem>>, %arg4: memref<128x128xbf16, #tpu.memory_space<vmem>>, %arg5: memref<1x128xf32, #tpu.memory_space<vmem>>, %arg6: memref<8x128xf32, #tpu.memory_space<vmem>>) attributes {dimension_semantics = [#tpu.dimension_semantics<parallel>], iteration_bounds = array<i64: 1>, scalar_prefetch = 0 : i64, scratch_operands = 0 : i64, tpu.core_type = #tpu.core_type<tc>, window_params = [{transform_indices = @transform_0, window_bounds = array<i64: 8, 64>}, {pipeline_mode = #tpu.pipeline_mode<synchronous>, transform_indices = @transform_1, window_bounds = array<i64: 64, 128>}, {pipeline_mode = #tpu.pipeline_mode<synchronous>, transform_indices = @transform_2, window_bounds = array<i64: 1, 128>}, {pipeline_mode = #tpu.pipeline_mode<synchronous>, transform_indices = @transform_3, window_bounds = array<i64: 128, 128>}, {pipeline_mode = #tpu.pipeline_mode<synchronous>, transform_indices = @transform_4, window_bounds = array<i64: 1, 128>}, {transform_indices = @transform_5, window_bounds = array<i64: 8, 128>}]} {
    %c0 = arith.constant 0 : index
    %c0_0 = arith.constant 0 : index
    %0 = vector.load %arg1[%c0, %c0_0] : memref<8x64xbf16, #tpu.memory_space<vmem>>, vector<8x64xbf16>
    %c0_1 = arith.constant 0 : index
    %c0_2 = arith.constant 0 : index
    %1 = vector.load %arg2[%c0_1, %c0_2] : memref<64x128xbf16, #tpu.memory_space<vmem>>, vector<64x128xbf16>
    %cst = arith.constant dense<0.000000e+00> : vector<8x128xf32>
    %2 = tpu.matmul %0, %1, %cst {dimension_numbers = #tpu.dot_dimension_numbers<[1], [0], [0], [1], [0, 0, 1, 1], [], []>} : vector<8x64xbf16>, vector<64x128xbf16>, vector<8x128xf32> -> vector<8x128xf32>
    %c0_3 = arith.constant 0 : index
    %c0_4 = arith.constant 0 : index
    %3 = vector.load %arg3[%c0_3, %c0_4] : memref<1x128xf32, #tpu.memory_space<vmem>>, vector<1x128xf32>
    %4 = vector.broadcast %3 : vector<1x128xf32> to vector<8x128xf32>
    %5 = arith.addf %2, %4 : vector<8x128xf32>
    %cst_5 = arith.constant 0.000000e+00 : f32
    %6 = vector.broadcast %cst_5 : f32 to vector<8x128xf32>
    %7 = arith.maximumf %5, %6 : vector<8x128xf32>
    %8 = arith.truncf %7 : vector<8x128xf32> to vector<8x128xbf16>
    %c0_6 = arith.constant 0 : index
    %c0_7 = arith.constant 0 : index
    %9 = vector.load %arg4[%c0_6, %c0_7] : memref<128x128xbf16, #tpu.memory_space<vmem>>, vector<128x128xbf16>
    %cst_8 = arith.constant dense<0.000000e+00> : vector<8x128xf32>
    %10 = tpu.matmul %8, %9, %cst_8 {dimension_numbers = #tpu.dot_dimension_numbers<[1], [0], [0], [1], [0, 0, 1, 1], [], []>} : vector<8x128xbf16>, vector<128x128xbf16>, vector<8x128xf32> -> vector<8x128xf32>
    %c0_9 = arith.constant 0 : index
    %c0_10 = arith.constant 0 : index
    %11 = vector.load %arg5[%c0_9, %c0_10] : memref<1x128xf32, #tpu.memory_space<vmem>>, vector<1x128xf32>
    %12 = vector.broadcast %11 : vector<1x128xf32> to vector<8x128xf32>
    %13 = arith.addf %10, %12 : vector<8x128xf32>
    %c0_11 = arith.constant 0 : index
    %c0_12 = arith.constant 0 : index
    %14 = vector.load %arg6[%c0_11, %c0_12] : memref<8x128xf32, #tpu.memory_space<vmem>>, vector<8x128xf32>
    tpu.vector_store %arg6[%c0_11, %c0_12], %13 {strides = array<i32>} : memref<8x128xf32, #tpu.memory_space<vmem>>, vector<8x128xf32>,
    return
  }
  func.func @transform_0(%arg0: i32) -> (i32, i32) {
    %c0_i32 = arith.constant 0 : i32
    %c0_i32_0 = arith.constant 0 : i32
    return %arg0, %c0_i32 : i32, i32
  }
  func.func @transform_1(%arg0: i32) -> (i32, i32) {
    %c0_i32 = arith.constant 0 : i32
    %c0_i32_0 = arith.constant 0 : i32
    %c0_i32_1 = arith.constant 0 : i32
    return %c0_i32, %c0_i32_0 : i32, i32
  }
  func.func @transform_2(%arg0: i32) -> (i32, i32) {
    %c0_i32 = arith.constant 0 : i32
    %c0_i32_0 = arith.constant 0 : i32
    %c0_i32_1 = arith.constant 0 : i32
    return %c0_i32, %c0_i32_0 : i32, i32
  }
  func.func @transform_3(%arg0: i32) -> (i32, i32) {
    %c0_i32 = arith.constant 0 : i32
    %c0_i32_0 = arith.constant 0 : i32
    %c0_i32_1 = arith.constant 0 : i32
    return %c0_i32, %c0_i32_0 : i32, i32
  }
  func.func @transform_4(%arg0: i32) -> (i32, i32) {
    %c0_i32 = arith.constant 0 : i32
    %c0_i32_0 = arith.constant 0 : i32
    %c0_i32_1 = arith.constant 0 : i32
    return %c0_i32, %c0_i32_0 : i32, i32
  }
  func.func @transform_5(%arg0: i32) -> (i32, i32) {
    %c0_i32 = arith.constant 0 : i32
    %c0_i32_0 = arith.constant 0 : i32
    return %arg0, %c0_i32 : i32, i32
  }
}

</mosaic_0001>

<llo_original>
// kernel: encoder_forward.1
$region0: #{encoder_forward.1}
  #allocation0 [shape = 'u32[]', space=smem, size = 0x4, offset = 0x4, fixed_abs, tag = 'smem constant byte address 0x4 - core index']
  #allocation1 [shape = 'u32[72,128]{1,0:T(1,128)}', space=vmem, size = 0x9000, scoped, tag = 'internal scratch']
  %s0 = inlined_call_operand.vmem [shape: bf16[8,64], index: 0, kind: input, shape index: {}]
  %s1 = inlined_call_operand.hbm [shape: bf16[64,128], index: 1, kind: input, shape index: {}]
  %s2 = inlined_call_operand.vmem [shape: f32[1,128], index: 2, kind: input, shape index: {}]
  %s3 = inlined_call_operand.hbm [shape: bf16[128,128], index: 3, kind: input, shape index: {}]
  %s4 = inlined_call_operand.vmem [shape: f32[1,128], index: 4, kind: input, shape index: {}]
  %s5 = inlined_call_operand.hbm [shape: f32[8,128], index: 5, kind: output, shape index: {}]
  %s6 = sld [smem:[#allocation0]]
  $region38: #{encoder_forward.1} parent=0
    _
  %s8 = ssub.s32 1, %s6
  %s9 = scalar_select 0, %s8, %s6
  $region1: #{encoder_forward.1} parent=0
    #allocation2 [shape = 'u8[16384]{0}', space=vmem, size = 0x4000, scoped, tag = 'input window, operand 1, single buffered']
    #allocation3 [shape = 's32[1]{0}', space=sflag, size = 0x4, scoped, tag = 'scoped memory for encoder_forward.1']
    #allocation4 [shape = 's32[1]{0}', space=sflag, size = 0x4, scoped, tag = 'scoped memory for encoder_forward.1']
    #allocation5 [shape = 'u8[32768]{0}', space=vmem, size = 0x8000, scoped, tag = 'input window, operand 3, single buffered']
    #allocation6 [shape = 's32[1]{0}', space=sflag, size = 0x4, scoped, tag = 'scoped memory for encoder_forward.1']
    #allocation7 [shape = 'u8[4096]{0}', space=vmem, size = 0x1000, scoped, tag = 'output window, operand 0, single buffered']
    %10 = vsyncpa [#allocation3], 0
    %11 = vsyncpa [#allocation6], 0
    %12 = vsyncpa [#allocation4], 0
    // Predicated region
    $region2: #{encoder_forward.1} parent=1 // pred_check
      _
    $region3: #{encoder_forward.1} parent=1 // pred_check_branch
      %14 = sbr.rel (0) target = $region5
    $region4: #{encoder_forward.1} parent=1 // pred_region
      _
    $region5: #{encoder_forward.1} parent=1 // pred_fallthru
      _
    // Predicated region
    $region6: #{encoder_forward.1} parent=1 // pred_check
      _
    $region7: #{encoder_forward.1} parent=1 // pred_check_branch
      %16 = sbr.rel (0) target = $region9
    $region8: #{encoder_forward.1} parent=1 // pred_region
      %18 = vsyncadd [#allocation3], 0
      %s19 = sshll.u32 %s1, 4
      %s20 = int_to_ptr.hbm [resolvable:$true] %s19
      %s21 = sshll.u32 [#allocation2], 4
      %s22 = int_to_ptr.vmem [resolvable:$true] %s21
      %27 = dma.hbm_to_vmem [thread:$0]  %s20, 512, %s22, [#allocation3], 64, 64, 4
    $region9: #{encoder_forward.1} parent=1 // pred_fallthru
      _
    // Predicated region
    $region10: #{encoder_forward.1} parent=1 // pred_check
      _
    $region11: #{encoder_forward.1} parent=1 // pred_check_branch
      %29 = sbr.rel (0) target = $region13
    $region12: #{encoder_forward.1} parent=1 // pred_region
      _
    $region13: #{encoder_forward.1} parent=1 // pred_fallthru
      _
    // Predicated region
    $region14: #{encoder_forward.1} parent=1 // pred_check
      _
    $region15: #{encoder_forward.1} parent=1 // pred_check_branch
      %31 = sbr.rel (0) target = $region17
    $region16: #{encoder_forward.1} parent=1 // pred_region
      %33 = vsyncadd [#allocation6], 0
      %s34 = sshll.u32 %s3, 4
      %s35 = int_to_ptr.hbm [resolvable:$true] %s34
      %s36 = sshll.u32 [#allocation5], 4
      %s37 = int_to_ptr.vmem [resolvable:$true] %s36
      %42 = dma.hbm_to_vmem [thread:$0]  %s35, 1024, %s37, [#allocation6], 64, 64, 4
    $region17: #{encoder_forward.1} parent=1 // pred_fallthru
      _
    // Predicated region
    $region18: #{encoder_forward.1} parent=1 // pred_check
      _
    $region19: #{encoder_forward.1} parent=1 // pred_check_branch
      %44 = sbr.rel (0) target = $region21
    $region20: #{encoder_forward.1} parent=1 // pred_region
      _
    $region21: #{encoder_forward.1} parent=1 // pred_fallthru
      _
    // Predicated region
    $region22: #{encoder_forward.1} parent=1 // pred_check
      _
    $region23: #{encoder_forward.1} parent=1 // pred_check_branch
      %46 = sbr.rel (0) target = $region25
    $region24: #{encoder_forward.1} parent=1 // pred_region
      %48 = dma.done [#allocation3], 512
    $region25: #{encoder_forward.1} parent=1 // pred_fallthru
      _
    // Predicated region
    $region26: #{encoder_forward.1} parent=1 // pred_check
      _
    $region27: #{encoder_forward.1} parent=1 // pred_check_branch
      %50 = sbr.rel (0) target = $region29
    $region28: #{encoder_forward.1} parent=1 // pred_region
      %52 = dma.done [#allocation6], 1024
    $region29: #{encoder_forward.1} parent=1 // pred_fallthru
      _
    %v54 = vld [vmem:[%s0] sm:$0xf]
    %v55 = vld [vmem:[#allocation2] sm:$0xf]
    %v56 = vld [vmem:[#allocation2 + $0x4] sm:$0xf]
    %v57 = vld [vmem:[#allocation2 + $0x8] sm:$0xf]
    %v58 = vld [vmem:[#allocation2 + $0xc] sm:$0xf]
    %v59 = vld [vmem:[#allocation2 + $0x10] sm:$0xf]
    %v60 = vld [vmem:[#allocation2 + $0x14] sm:$0xf]
    %v61 = vld [vmem:[#allocation2 + $0x18] sm:$0xf]
    %v62 = vld [vmem:[#allocation2 + $0x1c] sm:$0xf]
    %v63 = vld [vmem:[%s2] sm:$0x1]
    %v65 = vperm.slane %v63, 0
    %v75 = vunpack.c.l.b16 %v55
    %v76 = vunpack.c.l.b16 %v56
    %v77 = vunpack.c.l.b16 %v57
    %v78 = vunpack.c.l.b16 %v58
    %v79 = vunpack.c.l.b16 %v59
    %v80 = vunpack.c.l.b16 %v60
    %v81 = vunpack.c.l.b16 %v61
    %v82 = vunpack.c.l.b16 %v62
    %v83 = vpack.c.b16 %v76, %v75
    %v84 = vpack.c.b16 %v78, %v77
    %v85 = vpack.c.b16 %v80, %v79
    %v86 = vpack.c.b16 %v82, %v81
    %vm91 = vcmask 523264
    %v93 = vsel %vm91, %v54, 0
    %95 = vmatpush.bf16.msra.mxu0 0
    %96 = vmatpush.bf16.msra.mxu0 0
    %97 = vmatpush.bf16.msra.mxu0 0
    %98 = vmatpush.bf16.msra.mxu0 0
    %99 = vmatpush.bf16.msra.mxu0 %v86
    %100 = vmatpush.bf16.msra.mxu0 %v85
    %101 = vmatpush.bf16.msra.mxu0 %v84
    %102 = vmatpush.bf16.msra.mxu0 %v83
    %103 = vmatmul.bf16.gmra.mxu0 %v93
    %v104 = vpop.f32.mrf.mxu0
    %v105 = vadd.f32 %v65, %v104
    %v106 = vpop.f32.mrf.mxu0
    %107 = vdwg.mxu0
    %v108 = vmax.f32 %v105, 0.0
    %v109 = vpack.c.bf16 %v108, %v108
    %v110 = vld [vmem:[#allocation5] sm:$0xf]
    %v111 = vld [vmem:[#allocation5 + $0x4] sm:$0xf]
    %v112 = vld [vmem:[#allocation5 + $0x8] sm:$0xf]
    %v113 = vld [vmem:[#allocation5 + $0xc] sm:$0xf]
    %v114 = vld [vmem:[#allocation5 + $0x10] sm:$0xf]
    %v115 = vld [vmem:[#allocation5 + $0x14] sm:$0xf]
    %v116 = vld [vmem:[#allocation5 + $0x18] sm:$0xf]
    %v117 = vld [vmem:[#allocation5 + $0x1c] sm:$0xf]
    %v118 = vld [vmem:[#allocation5 + $0x20] sm:$0xf]
    %v119 = vld [vmem:[#allocation5 + $0x24] sm:$0xf]
    %v120 = vld [vmem:[#allocation5 + $0x28] sm:$0xf]
    %v121 = vld [vmem:[#allocation5 + $0x2c] sm:$0xf]
    %v122 = vld [vmem:[#allocation5 + $0x30] sm:$0xf]
    %v123 = vld [vmem:[#allocation5 + $0x34] sm:$0xf]
    %v124 = vld [vmem:[#allocation5 + $0x38] sm:$0xf]
    %v125 = vld [vmem:[#allocation5 + $0x3c] sm:$0xf]
    %v126 = vld [vmem:[%s4] sm:$0x1]
    %v128 = vperm.slane %v126, 0
    %v146 = vunpack.c.l.b16 %v110
    %v147 = vunpack.c.l.b16 %v111
    %v148 = vunpack.c.l.b16 %v112
    %v149 = vunpack.c.l.b16 %v113
    %v150 = vunpack.c.l.b16 %v114
    %v151 = vunpack.c.l.b16 %v115
    %v152 = vunpack.c.l.b16 %v116
    %v153 = vunpack.c.l.b16 %v117
    %v154 = vunpack.c.l.b16 %v118
    %v155 = vunpack.c.l.b16 %v119
    %v156 = vunpack.c.l.b16 %v120
    %v157 = vunpack.c.l.b16 %v121
    %v158 = vunpack.c.l.b16 %v122
    %v159 = vunpack.c.l.b16 %v123
    %v160 = vunpack.c.l.b16 %v124
    %v161 = vunpack.c.l.b16 %v125
    %v162 = vpack.c.b16 %v147, %v146
    %v163 = vpack.c.b16 %v149, %v148
    %v164 = vpack.c.b16 %v151, %v150
    %v165 = vpack.c.b16 %v153, %v152
    %v166 = vpack.c.b16 %v155, %v154
    %v167 = vpack.c.b16 %v157, %v156
    %v168 = vpack.c.b16 %v159, %v158
    %v169 = vpack.c.b16 %v161, %v160
    %178 = vmatpush.bf16.msra.mxu0 %v169
    %179 = vmatpush.bf16.msra.mxu0 %v168
    %180 = vmatpush.bf16.msra.mxu0 %v167
    %181 = vmatpush.bf16.msra.mxu0 %v166
    %182 = vmatpush.bf16.msra.mxu0 %v165
    %183 = vmatpush.bf16.msra.mxu0 %v164
    %184 = vmatpush.bf16.msra.mxu0 %v163
    %185 = vmatpush.bf16.msra.mxu0 %v162
    %186 = vmatmul.bf16.gmra.mxu0 %v109
    %v187 = vpop.f32.mrf.mxu0
    %v188 = vadd.f32 %v128, %v187
    %v189 = vpop.f32.mrf.mxu0
    %190 = vdwg.mxu0
    %191 = vst [vmem:[#allocation7] sm:$0xff] %v188
    // Predicated region
    $region30: #{encoder_forward.1} parent=1 // pred_check
      _
    $region31: #{encoder_forward.1} parent=1 // pred_check_branch
      %193 = sbr.rel (0) target = $region33
    $region32: #{encoder_forward.1} parent=1 // pred_region
      %195 = vsyncadd [#allocation4], 0
      %s197 = sshll.u32 [#allocation7], 4
      %s198 = int_to_ptr.vmem [resolvable:$true] %s197
      %s199 = sshll.u32 %s5, 4
      %s200 = int_to_ptr.hbm [resolvable:$true] %s199
      %202 = dma.vmem_to_hbm [thread:$0]  %s198, 128, %s200, [#allocation4]
    $region33: #{encoder_forward.1} parent=1 // pred_fallthru
      _
    // Predicated region
    $region34: #{encoder_forward.1} parent=1 // pred_check
      _
    $region35: #{encoder_forward.1} parent=1 // pred_check_branch
      %204 = sbr.rel (0) target = $region37
    $region36: #{encoder_forward.1} parent=1 // pred_region
      %206 = dma.done [#allocation4], 128
    $region37: #{encoder_forward.1} parent=1 // pred_fallthru
      _
    %207 = vsyncpa [#allocation3], 1
    %208 = vsyncpa [#allocation6], 1
    %209 = vsyncpa [#allocation4], 1

</llo_original>
